<compile_context>
chip_gen: v7x
topology: tpu7x:2x2x1
jax: 0.10.0
libtpu: 0.0.40
codegen_flags: <defaults>
</compile_context>

<pallas_src>
import functools
import math
from typing import NamedTuple

import jax
import jax.numpy as jnp
from jax.experimental import pallas as pl
from jax.experimental.pallas import tpu as pltpu

_INV_SQRT2 = 1.0 / math.sqrt(2.0)


def _round_up(n, m):
    return ((n + m - 1) // m) * m


def _cdiv(a, b):
    return (a + b - 1) // b


# ---------------------------------------------------------------------------
# Feature probe: single-buffered (Buffered(1)) BlockSpec for grid-constant
# operands.  Falls back to the default double-buffered path if unsupported.
# ---------------------------------------------------------------------------
def _probe_buffered_single():
    if not hasattr(pl, "Buffered"):
        return False
    try:
        def k(x_ref, o_ref):
            o_ref[...] = x_ref[...] * 2.0

        fn = pl.pallas_call(
            k,
            out_shape=jax.ShapeDtypeStruct((16, 128), jnp.float32),
            grid=(2,),
            in_specs=[pl.BlockSpec((8, 128), lambda i: (0, 0),
                                   pipeline_mode=pl.Buffered(1))],
            out_specs=pl.BlockSpec((8, 128), lambda i: (i, 0)),
        )
        out = jax.block_until_ready(fn(jnp.ones((8, 128), jnp.float32)))
        return bool(jnp.all(out == 2.0))
    except Exception:
        return False


_BUFFERED_SINGLE = _probe_buffered_single()


def _vmem_budget():
    """~85% of per-core VMEM (v5e/v6e: 128 MiB, v7x: 64 MiB); conservative fallback."""
    try:
        cap = int(getattr(pltpu.get_tpu_info(), "vmem_capacity_bytes", 0))
    except Exception:
        cap = 0
    if cap <= 0:
        cap = 64 << 20
    return int(cap * 0.85)


# ---------------------------------------------------------------------------
# Kernels
# ---------------------------------------------------------------------------
def _ff_resident_kernel(x_ref, w1_ref, b1_ref, w2_ref, b2_ref, o_ref, acc_ref, *, chunk):
    """Both weights resident in VMEM. The hidden dim is processed in `chunk`-wide
    slabs so the GELU (VPU/EUP) of one slab overlaps the MXU matmuls of the
    neighbouring slabs and the live f32 hidden intermediate stays (tm, chunk)."""
    n_chunks = w1_ref.shape[1] // chunk
    x = x_ref[...]
    acc_ref[...] = jnp.broadcast_to(b2_ref[...].astype(jnp.float32), acc_ref.shape)
    for c in range(n_chunks):                       # static unroll, n_chunks is small
        lo = c * chunk
        h = jnp.dot(x, w1_ref[:, lo:lo + chunk], preferred_element_type=jnp.float32)
        h = h + b1_ref[:, lo:lo + chunk].astype(jnp.float32)
        h = 0.5 * h * (1.0 + jax.lax.erf(h * _INV_SQRT2))      # exact GELU
        acc_ref[...] += jnp.dot(h.astype(w2_ref.dtype), w2_ref[lo:lo + chunk, :],
                                preferred_element_type=jnp.float32)
    o_ref[...] = acc_ref[...].astype(o_ref.dtype)


def _ff_streamed_kernel(x_ref, w1_ref, b1_ref, w2_ref, b2_ref, o_ref, acc_ref):
    """Hidden dim tiled on the grid (last axis, 'arbitrary'): weights are streamed
    in (E, th)/(th, E) slabs; VMEM stays bounded for arbitrarily large E."""
    h_idx = pl.program_id(1)

    @pl.when(h_idx == 0)
    def _():
        acc_ref[...] = jnp.broadcast_to(b2_ref[...].astype(jnp.float32), acc_ref.shape)

    h = jnp.dot(x_ref[...], w1_ref[...], preferred_element_type=jnp.float32)
    h = h + b1_ref[...].astype(jnp.float32)
    h = 0.5 * h * (1.0 + jax.lax.erf(h * _INV_SQRT2))
    acc_ref[...] += jnp.dot(h.astype(w2_ref.dtype), w2_ref[...],
                            preferred_element_type=jnp.float32)

    @pl.when(h_idx == pl.num_programs(1) - 1)
    def _():
        o_ref[...] = acc_ref[...].astype(o_ref.dtype)


# ---------------------------------------------------------------------------
# Static planning (runs outside jit: hardware query + tile/path selection)
# ---------------------------------------------------------------------------
class _Plan(NamedTuple):
    streamed: bool
    row_tile: int
    chunk: int         # Path A: in-kernel hidden chunk; Path B: hidden grid tile th
    ek: int            # lane-padded embed used inside the kernel
    hp: int            # (padded) hidden dim used inside the kernel
    vmem_limit: int
    buffered: bool
    compute_dtype: str


def _make_plan(x_shape, x_dtype, row_tile, mxu_dtype, force_streamed):
    B, S, E = x_shape
    M = B * S
    cdt = jnp.dtype(mxu_dtype) if mxu_dtype is not None else jnp.dtype(x_dtype)
    o_item = jnp.dtype(x_dtype).itemsize
    c_item = cdt.itemsize

    # Lane-pad toy embeds: E < 128 lowers to masked vst partial stores otherwise.
    Ek = E if E >= 128 else 128

    # Sublane packing of the token dim for in/out tiles.
    pack = max(8, 32 // c_item, 32 // o_item)

    if row_tile is None:
        if Ek <= 512:
            row_tile = 1024        # small-E shapes are HBM-bound on x/out: big tiles
        elif Ek < 2048:
            row_tile = 512
        else:
            row_tile = 256         # keep the (tm, E) f32 hidden/acc inside VMEM
    row_tile = min(row_tile, _round_up(M, pack))
    row_tile = max(pack, (row_tile // pack) * pack)
    # Give the second TensorCore (v7x megacore) work when there is enough of it.
    while _cdiv(M, row_tile) < 2 and row_tile >= 2 * max(pack, 128):
        row_tile //= 2

    budget = _vmem_budget()
    headroom = 6 << 20
    wbuf = 1 if _BUFFERED_SINGLE else 2

    def io_tiles_bytes(tm):
        # double-buffered x and out tiles + f32 accumulator scratch
        return 2 * tm * Ek * c_item + 2 * tm * Ek * o_item + tm * Ek * 4

    need_resident = wbuf * 2 * (Ek * Ek + Ek) * c_item + io_tiles_bytes(row_tile) + headroom
    streamed = bool(force_streamed) or need_resident > budget

    if not streamed:
        hp = Ek
        if Ek <= 512:
            chunk = Ek
        else:
            chunk = next((c for c in (512, 256, 128) if Ek % c == 0), Ek)
    else:
        hp = _round_up(Ek, 128)
        th = 512 if hp % 512 == 0 else (256 if hp % 256 == 0 else 128)

        def need_streamed(tm, th_):
            return (2 * (Ek * th_ + th_ * Ek + th_) * c_item
                    + io_tiles_bytes(tm) + headroom)

        tm = None
        for cand in (1024, 512, 256, 128):   # keep tm large so weight re-streaming stays compute-bound
            t = max(pack, (min(cand, _round_up(M, pack)) // pack) * pack)
            if need_streamed(t, th) <= budget:
                tm = t
                break
        if tm is None:
            tm = max(pack, (min(128, _round_up(M, pack)) // pack) * pack)
            while th > 128 and need_streamed(tm, th) > budget:
                th //= 2
        row_tile, chunk = tm, th

    return _Plan(bool(streamed), int(row_tile), int(chunk), int(Ek), int(hp),
                 int(budget), bool(_BUFFERED_SINGLE), cdt.name)


# ---------------------------------------------------------------------------
# Wrapper
# ---------------------------------------------------------------------------
@functools.partial(jax.jit, static_argnames=("plan",))
def _feed_forward_impl(x, w1, b1, w2, b2, *, plan):
    B, S, E = x.shape
    M = B * S
    out_dtype = x.dtype
    cdt = jnp.dtype(plan.compute_dtype)

    # Pinned dtype policy: one compute dtype feeds the MXU; accumulation in f32.
    x = x.astype(cdt)
    w1 = w1.astype(cdt)
    w2 = w2.astype(cdt)

    Ek, Hp, tm = plan.ek, plan.hp, plan.row_tile
    x2d = x.reshape(M, E)
    if Ek != E:   # zero-pad feature/lane dims (exact: pads contribute exactly 0)
        x2d = jnp.pad(x2d, ((0, 0), (0, Ek - E)))
        w1 = jnp.pad(w1, ((0, Ek - E), (0, 0)))
        w2 = jnp.pad(w2, ((0, 0), (0, Ek - E)))
        b2 = jnp.pad(b2, ((0, Ek - E),))
    if Hp != E:   # zero-pad hidden dim (exact: GELU(0)=0 rows hit zero W2 rows)
        w1 = jnp.pad(w1, ((0, 0), (0, Hp - E)))
        b1 = jnp.pad(b1, ((0, Hp - E),))
        w2 = jnp.pad(w2, ((0, Hp - E), (0, 0)))
    b1r = b1.reshape(1, Hp)
    b2r = b2.reshape(1, Ek)

    def const_spec(shape):
        idx = lambda *_: (0,) * len(shape)
        if plan.buffered:     # grid-constant operand: one VMEM buffer is enough
            return pl.BlockSpec(shape, idx, pipeline_mode=pl.Buffered(1))
        return pl.BlockSpec(shape, idx)

    cost = pl.CostEstimate(
        flops=4 * M * Ek * Hp + 10 * M * Hp,
        transcendentals=M * Hp,
        bytes_accessed=(M * Ek * (cdt.itemsize + jnp.dtype(out_dtype).itemsize)
                        + 2 * Ek * Hp * cdt.itemsize
                        + (Hp + Ek) * b1.dtype.itemsize),
    )

    if not plan.streamed:
        # Path A: both weights resident (single-buffered), in-kernel hidden chunking.
        grid = (_cdiv(M, tm),)
        out2d = pl.pallas_call(
            functools.partial(_ff_resident_kernel, chunk=plan.chunk),
            out_shape=jax.ShapeDtypeStruct((M, Ek), out_dtype),
            grid_spec=pltpu.PrefetchScalarGridSpec(
                num_scalar_prefetch=0,
                grid=grid,
                in_specs=[
                    pl.BlockSpec((tm, Ek), lambda i: (i, 0)),   # x row tile
                    const_spec((Ek, Hp)),                       # W1 (resident)
                    const_spec((1, Hp)),                        # b1
                    const_spec((Hp, Ek)),                       # W2 (resident)
                    const_spec((1, Ek)),                        # b2
                ],
                out_specs=pl.BlockSpec((tm, Ek), lambda i: (i, 0)),
                scratch_shapes=[pltpu.VMEM((tm, Ek), jnp.float32)],
            ),
            compiler_params=pltpu.CompilerParams(
                dimension_semantics=("parallel",),
                vmem_limit_bytes=plan.vmem_limit,
            ),
            cost_estimate=cost,
        )(x2d, w1, b1r, w2, b2r)
    else:
        # Path B: hidden dim on the grid, weights streamed, f32 accumulator scratch.
        # TODO(synk): megacore-split the hidden axis too and add an fp8 weight path for v7x.
        th = plan.chunk
        grid = (_cdiv(M, tm), Hp // th)   # reduction (hidden) axis last, 'arbitrary'
        out2d = pl.pallas_call(
            _ff_streamed_kernel,
            out_shape=jax.ShapeDtypeStruct((M, Ek), out_dtype),
            grid_spec=pltpu.PrefetchScalarGridSpec(
                num_scalar_prefetch=0,
                grid=grid,
                in_specs=[
                    pl.BlockSpec((tm, Ek), lambda i, h: (i, 0)),   # x (resident across h)
                    pl.BlockSpec((Ek, th), lambda i, h: (0, h)),   # W1 hidden slab
                    pl.BlockSpec((1, th), lambda i, h: (0, h)),    # b1 slab
                    pl.BlockSpec((th, Ek), lambda i, h: (h, 0)),   # W2 hidden slab
                    const_spec((1, Ek)),                           # b2
                ],
                out_specs=pl.BlockSpec((tm, Ek), lambda i, h: (i, 0)),
                scratch_shapes=[pltpu.VMEM((tm, Ek), jnp.float32)],
            ),
            compiler_params=pltpu.CompilerParams(
                dimension_semantics=("parallel", "arbitrary"),
                vmem_limit_bytes=plan.vmem_limit,
            ),
            cost_estimate=cost,
        )(x2d, w1, b1r, w2, b2r)

    if Ek != E:
        out2d = out2d[:, :E]
    return out2d.reshape(B, S, E)


def feed_forward(x, w1, b1, w2, b2, *, row_tile=None, mxu_dtype=None, force_streamed=False):
    """x: (B, S, E); w1, w2: (E_in, E_out) (pre-transposed vs PyTorch); b1, b2: (E,).

    mxu_dtype: optional compute dtype for the MXU (e.g. jnp.bfloat16); f32 accumulation,
    bias add and exact GELU are kept in f32. force_streamed forces the hidden-dim-tiled
    (weight streaming) path normally used only when resident weights don't fit VMEM.
    """
    plan = _make_plan(x.shape, x.dtype, row_tile, mxu_dtype, force_streamed)
    return _feed_forward_impl(x, w1, b1, w2, b2, plan=plan)


def init_params(key, embed_size, dtype=jnp.float32):
    """Deterministic init mimicking nn.Linear default (uniform +/- 1/sqrt(fan_in))."""
    k1, k2, k3, k4 = jax.random.split(key, 4)
    bound = 1.0 / math.sqrt(embed_size)
    # stored as (in, out) so the kernel can do x @ W
    w1 = jax.random.uniform(k1, (embed_size, embed_size), dtype, -bound, bound)
    b1 = jax.random.uniform(k2, (embed_size,), dtype, -bound, bound)
    w2 = jax.random.uniform(k3, (embed_size, embed_size), dtype, -bound, bound)
    b2 = jax.random.uniform(k4, (embed_size,), dtype, -bound, bound)
    return w1, b1, w2, b2


def _reference(x, w1, b1, w2, b2):
    h = jax.nn.gelu(x @ w1 + b1, approximate=False)
    return h @ w2 + b2


if __name__ == "__main__":
    key = jax.random.PRNGKey(0)
    k1, k2, k3, k4, k5, k6, k7, k8 = jax.random.split(key, 8)

    # Case 1: module-sized shapes (B=2, S=8, E=32) — exercises the E<128 lane-pad path.
    B, S, E = 2, 8, 32
    x = jax.random.normal(k1, (B, S, E), dtype=jnp.float32)
    p = init_params(k2, E)
    out = jax.block_until_ready(feed_forward(x, *p))
    ref = _reference(x, *p)
    assert out.shape == (B, S, E)
    assert jnp.allclose(out, ref, atol=1e-5, rtol=1e-5), "mismatch vs reference (case 1)"

    # Case 2: token count not tile-aligned (M=15) — partial tail block, no pad/slice.
    B2, S2, E2 = 3, 5, 128
    x2 = jax.random.normal(k3, (B2, S2, E2), dtype=jnp.float32)
    p2 = init_params(k4, E2)
    out2 = jax.block_until_ready(feed_forward(x2, *p2))
    ref2 = _reference(x2, *p2)
    assert out2.shape == (B2, S2, E2)
    assert jnp.allclose(out2, ref2, atol=1e-4, rtol=1e-4), "mismatch vs reference (case 2)"

    # Case 3: streamed / hidden-dim-grid path (what large E uses on v7x), forced at small E.
    B3, S3, E3 = 2, 24, 384
    x3 = jax.random.normal(k5, (B3, S3, E3), dtype=jnp.float32)
    p3 = init_params(k6, E3)
    out3 = jax.block_until_ready(feed_forward(x3, *p3, force_streamed=True))
    ref3 = _reference(x3, *p3)
    assert out3.shape == (B3, S3, E3)
    assert jnp.allclose(out3, ref3, atol=5e-4, rtol=5e-4), "mismatch vs reference (case 3)"

    # Case 4: optional bf16 MXU policy (numerics intentionally differ from f32; loose check).
    B4, S4, E4 = 2, 64, 256
    x4 = jax.random.normal(k7, (B4, S4, E4), dtype=jnp.float32)
    p4 = init_params(k8, E4)
    out4 = jax.block_until_ready(feed_forward(x4, *p4, mxu_dtype=jnp.bfloat16))
    ref4 = _reference(x4, *p4)
    assert out4.shape == (B4, S4, E4) and out4.dtype == x4.dtype
    assert bool(jnp.all(jnp.isfinite(out4)))
    assert jnp.allclose(out4, ref4, atol=1e-1, rtol=1e-1), "mismatch vs reference (case 4)"

    print("KERNEL_OK")
</pallas_src>

<mosaic_0001>
module attributes {stable_mosaic.version = 11 : i64} {
  func.func @k(%arg0: i32, %arg1: memref<8x128xf32, #tpu.memory_space<vmem>>, %arg2: memref<8x128xf32, #tpu.memory_space<vmem>>) attributes {dimension_semantics = [#tpu.dimension_semantics<arbitrary>], iteration_bounds = array<i64: 2>, scalar_prefetch = 0 : i64, scratch_operands = 0 : i64, tpu.core_type = #tpu.core_type<tc>, window_params = [{pipeline_mode = #tpu.pipeline_mode<synchronous>, transform_indices = @transform_0, window_bounds = array<i64: 8, 128>}, {transform_indices = @transform_1, window_bounds = array<i64: 8, 128>}]} {
    %c0 = arith.constant 0 : index
    %c0_0 = arith.constant 0 : index
    %0 = vector.load %arg1[%c0, %c0_0] : memref<8x128xf32, #tpu.memory_space<vmem>>, vector<8x128xf32>
    %cst = arith.constant 2.000000e+00 : f32
    %1 = vector.broadcast %cst : f32 to vector<8x128xf32>
    %2 = arith.mulf %0, %1 : vector<8x128xf32>
    %c0_1 = arith.constant 0 : index
    %c0_2 = arith.constant 0 : index
    %3 = vector.load %arg2[%c0_1, %c0_2] : memref<8x128xf32, #tpu.memory_space<vmem>>, vector<8x128xf32>
    tpu.vector_store %arg2[%c0_1, %c0_2], %2 {strides = array<i32>} : memref<8x128xf32, #tpu.memory_space<vmem>>, vector<8x128xf32>,
    return
  }
  func.func @transform_0(%arg0: i32) -> (i32, i32) {
    %c0_i32 = arith.constant 0 : i32
    %c0_i32_0 = arith.constant 0 : i32
    %c0_i32_1 = arith.constant 0 : i32
    return %c0_i32, %c0_i32_0 : i32, i32
  }
  func.func @transform_1(%arg0: i32) -> (i32, i32) {
    %c0_i32 = arith.constant 0 : i32
    %c0_i32_0 = arith.constant 0 : i32
    return %arg0, %c0_i32 : i32, i32
  }
}

module attributes {stable_mosaic.version = 11 : i64} {
  func.func @_ff_resident_kernel(%arg0: i32, %arg1: memref<16x128xf32, #tpu.memory_space<vmem>>, %arg2: memref<128x128xf32, #tpu.memory_space<vmem>>, %arg3: memref<1x128xf32, #tpu.memory_space<vmem>>, %arg4: memref<128x128xf32, #tpu.memory_space<vmem>>, %arg5: memref<1x128xf32, #tpu.memory_space<vmem>>, %arg6: memref<16x128xf32, #tpu.memory_space<vmem>>, %arg7: memref<16x128xf32, #tpu.memory_space<vmem>>) attributes {dimension_semantics = [#tpu.dimension_semantics<parallel>], iteration_bounds = array<i64: 1>, scalar_prefetch = 0 : i64, scratch_operands = 1 : i64, tpu.core_type = #tpu.core_type<tc>, window_params = [{transform_indices = @transform_0, window_bounds = array<i64: 16, 128>}, {pipeline_mode = #tpu.pipeline_mode<synchronous>, transform_indices = @transform_1, window_bounds = array<i64: 128, 128>}, {pipeline_mode = #tpu.pipeline_mode<synchronous>, transform_indices = @transform_2, window_bounds = array<i64: 1, 128>}, {pipeline_mode = #tpu.pipeline_mode<synchronous>, transform_indices = @transform_3, window_bounds = array<i64: 128, 128>}, {pipeline_mode = #tpu.pipeline_mode<synchronous>, transform_indices = @transform_4, window_bounds = array<i64: 1, 128>}, {transform_indices = @transform_5, window_bounds = array<i64: 16, 128>}]} {
    %c0 = arith.constant 0 : index
    %c0_0 = arith.constant 0 : index
    %0 = vector.load %arg1[%c0, %c0_0] : memref<16x128xf32, #tpu.memory_space<vmem>>, vector<16x128xf32>
    %c0_1 = arith.constant 0 : index
    %c0_2 = arith.constant 0 : index
    %1 = vector.load %arg5[%c0_1, %c0_2] : memref<1x128xf32, #tpu.memory_space<vmem>>, vector<1x128xf32>
    %2 = vector.shape_cast %1 : vector<1x128xf32> to vector<1x128xf32>
    %3 = vector.broadcast %2 : vector<1x128xf32> to vector<16x128xf32>
    %c0_3 = arith.constant 0 : index
    %c0_4 = arith.constant 0 : index
    %4 = vector.load %arg7[%c0_3, %c0_4] : memref<16x128xf32, #tpu.memory_space<vmem>>, vector<16x128xf32>
    tpu.vector_store %arg7[%c0_3, %c0_4], %3 {strides = array<i32>} : memref<16x128xf32, #tpu.memory_space<vmem>>, vector<16x128xf32>,
    %c0_5 = arith.constant 0 : index
    %c0_6 = arith.constant 0 : index
    %5 = vector.load %arg2[%c0_5, %c0_6] : memref<128x128xf32, #tpu.memory_space<vmem>>, vector<128x128xf32>
    %cst = arith.constant dense<0.000000e+00> : vector<16x128xf32>
    %6 = tpu.matmul %0, %5, %cst {dimension_numbers = #tpu.dot_dimension_numbers<[1], [0], [0], [1], [0, 0, 1, 1], [], []>} : vector<16x128xf32>, vector<128x128xf32>, vector<16x128xf32> -> vector<16x128xf32>
    %c0_7 = arith.constant 0 : index
    %c0_8 = arith.constant 0 : index
    %7 = vector.load %arg3[%c0_7, %c0_8] : memref<1x128xf32, #tpu.memory_space<vmem>>, vector<1x128xf32>
    %8 = vector.broadcast %7 : vector<1x128xf32> to vector<16x128xf32>
    %9 = arith.addf %6, %8 : vector<16x128xf32>
    %cst_9 = arith.constant 5.000000e-01 : f32
    %10 = vector.broadcast %cst_9 : f32 to vector<16x128xf32>
    %11 = arith.mulf %10, %9 : vector<16x128xf32>
    %cst_10 = arith.constant 0.707106769 : f32
    %12 = vector.broadcast %cst_10 : f32 to vector<16x128xf32>
    %13 = arith.mulf %9, %12 : vector<16x128xf32>
    %14 = math.erf %13 : vector<16x128xf32>
    %cst_11 = arith.constant 1.000000e+00 : f32
    %15 = vector.broadcast %cst_11 : f32 to vector<16x128xf32>
    %16 = arith.addf %15, %14 : vector<16x128xf32>
    %17 = arith.mulf %11, %16 : vector<16x128xf32>
    %c0_12 = arith.constant 0 : index
    %c0_13 = arith.constant 0 : index
    %18 = vector.load %arg7[%c0_12, %c0_13] : memref<16x128xf32, #tpu.memory_space<vmem>>, vector<16x128xf32>
    %c0_14 = arith.constant 0 : index
    %c0_15 = arith.constant 0 : index
    %19 = vector.load %arg4[%c0_14, %c0_15] : memref<128x128xf32, #tpu.memory_space<vmem>>, vector<128x128xf32>
    %cst_16 = arith.constant dense<0.000000e+00> : vector<16x128xf32>
    %20 = tpu.matmul %17, %19, %cst_16 {dimension_numbers = #tpu.dot_dimension_numbers<[1], [0], [0], [1], [0, 0, 1, 1], [], []>} : vector<16x128xf32>, vector<128x128xf32>, vector<16x128xf32> -> vector<16x128xf32>
    %21 = arith.addf %18, %20 : vector<16x128xf32>
    %c0_17 = arith.constant 0 : index
    %c0_18 = arith.constant 0 : index
    %22 = vector.load %arg7[%c0_17, %c0_18] : memref<16x128xf32, #tpu.memory_space<vmem>>, vector<16x128xf32>
    tpu.vector_store %arg7[%c0_17, %c0_18], %21 {strides = array<i32>} : memref<16x128xf32, #tpu.memory_space<vmem>>, vector<16x128xf32>,
    %c0_19 = arith.constant 0 : index
    %c0_20 = arith.constant 0 : index
    %23 = vector.load %arg7[%c0_19, %c0_20] : memref<16x128xf32, #tpu.memory_space<vmem>>, vector<16x128xf32>
    %c0_21 = arith.constant 0 : index
    %c0_22 = arith.constant 0 : index
    %24 = vector.load %arg6[%c0_21, %c0_22] : memref<16x128xf32, #tpu.memory_space<vmem>>, vector<16x128xf32>
    tpu.vector_store %arg6[%c0_21, %c0_22], %23 {strides = array<i32>} : memref<16x128xf32, #tpu.memory_space<vmem>>, vector<16x128xf32>,
    return
  }
  func.func @transform_0(%arg0: i32) -> (i32, i32) {
    %c0_i32 = arith.constant 0 : i32
    %c0_i32_0 = arith.constant 0 : i32
    return %arg0, %c0_i32 : i32, i32
  }
  func.func @transform_1(%arg0: i32) -> (i32, i32) {
    %c0_i32 = arith.constant 0 : i32
    %c0_i32_0 = arith.constant 0 : i32
    %c0_i32_1 = arith.constant 0 : i32
    return %c0_i32, %c0_i32_0 : i32, i32
  }
  func.func @transform_2(%arg0: i32) -> (i32, i32) {
    %c0_i32 = arith.constant 0 : i32
    %c0_i32_0 = arith.constant 0 : i32
    %c0_i32_1 = arith.constant 0 : i32
    return %c0_i32, %c0_i32_0 : i32, i32
  }
  func.func @transform_3(%arg0: i32) -> (i32, i32) {
    %c0_i32 = arith.constant 0 : i32
    %c0_i32_0 = arith.constant 0 : i32
    %c0_i32_1 = arith.constant 0 : i32
    return %c0_i32, %c0_i32_0 : i32, i32
  }
  func.func @transform_4(%arg0: i32) -> (i32, i32) {
    %c0_i32 = arith.constant 0 : i32
    %c0_i32_0 = arith.constant 0 : i32
    %c0_i32_1 = arith.constant 0 : i32
    return %c0_i32, %c0_i32_0 : i32, i32
  }
  func.func @transform_5(%arg0: i32) -> (i32, i32) {
    %c0_i32 = arith.constant 0 : i32
    %c0_i32_0 = arith.constant 0 : i32
    return %arg0, %c0_i32 : i32, i32
  }
}

</mosaic_0001>

<llo_original>
// kernel: tpu_custom_call.1
$region0: #{tpu_custom_call.1}
  #allocation0 [shape = 'u32[]', space=smem, size = 0x4, offset = 0x4, fixed_abs, tag = 'smem constant byte address 0x4 - core index']
  #allocation1 [shape = 'u32[144,128]{1,0:T(1,128)}', space=vmem, size = 0x12000, scoped, tag = 'internal scratch']
  %s0 = inlined_call_operand.hbm [shape: f32[8,128], index: 0, kind: input, shape index: {}]
  %s1 = inlined_call_operand.hbm [shape: f32[16,128], index: 1, kind: output, shape index: {}]
  %s2 = sld [smem:[#allocation0]]
  $region41: #{tpu_custom_call.1} parent=0
    _
  %s4 = ssub.s32 1, %s2
  %s5 = scalar_select 0, %s4, %s2
  $region1: #{tpu_custom_call.1} parent=0
    #allocation2 [shape = 'u8[4096]{0}', space=vmem, size = 0x1000, scoped, tag = 'input window, operand 0, single buffered']
    #allocation3 [shape = 's32[2]{0}', space=sflag, size = 0x8, scoped, tag = 'scoped memory for tpu_custom_call.1']
    #allocation4 [shape = 's32[2]{0}', space=sflag, size = 0x8, scoped, tag = 'scoped memory for tpu_custom_call.1']
    #allocation5 [shape = 'u8[8192]{0}', space=vmem, size = 0x2000, scoped, tag = 'output window, operand 0']
    %6 = vsyncpa [#allocation3], 0
    %7 = vsyncpa [#allocation4], 0
    %s8 = scalar_lea.sflag [#allocation4], 1
    %9 = vsyncpa %s8, 0
    loop: start=0, step=1, limit=4
    $region2: #{tpu_custom_call.1} parent=1 // loop_pre_header
      _
    $region3: #{tpu_custom_call.1} parent=1 // loop_header
      %s11 = sphi 0, %s15
      %p12 = scmp.ge.s32.totalorder %s11, 4
      %s19 = sphi 0, %s19
      %s21 = sphi 0, %s19
      %s22 = sphi 0, %s21
      %s36 = sphi 0, %s22
      %s42 = sphi 0, %s44
      %s45 = sphi 0, %s42
      %s46 = sphi 0, %s45
      %s62 = sphi 0, %s46
    $region4: #{tpu_custom_call.1} parent=1 // loop_header_branch
      %14 = sbr.rel (%p12) target = $region8
    $region5: #{tpu_custom_call.1} parent=1 // loop_body
      %s16 = ssub.s32 %s11, 1
      %s17 = ssub.s32 %s11, 2
      %s18 = sadd.s32 %s11, 1
      %s20 = sadd.s32 %s19, 1
      %p23 = scmp.eq.s32.totalorder %s11, 1
      %p24 = scmp.ne.s32.totalorder %s19, %s21
      %p25 = scmp.eq.s32.totalorder %s11, 0
      %p26 = por %p24, %p25
      %p27 = scmp.ne.s32.totalorder %s19, %s21
      %p28 = scmp.eq.s32.totalorder %s16, 1
      %p29 = por %p27, %p28
      %p30 = scmp.ne.s32.totalorder %s21, %s22
      %p31 = scmp.eq.s32.totalorder %s16, 0
      %p32 = por %p30, %p31
      %p33 = scmp.ne.s32.totalorder %s21, %s22
      %p34 = scmp.eq.s32.totalorder %s17, 1
      %p35 = por %p33, %p34
      %p37 = scmp.ne.s32.totalorder %s22, %s36
      %p38 = scmp.eq.s32.totalorder %s17, 0
      %p39 = por %p37, %p38
      %s40 = ssub.s32 %s11, %s18
      %p41 = scmp.eq.s32.totalorder %s40, 0
      %s43 = sadd.s32 %s42, 1
      %s44 = scalar_select %p41, %s42, %s43
      %p47 = pneg %p41
      %p48 = scmp.eq.s32.totalorder %s11, 1
      %p49 = por %p47, %p48
      %p50 = scmp.ne.s32.totalorder %s42, %s45
      %p51 = scmp.eq.s32.totalorder %s11, 0
      %p52 = por %p50, %p51
      %p53 = scmp.ne.s32.totalorder %s42, %s45
      %p54 = scmp.eq.s32.totalorder %s16, 1
      %p55 = por %p53, %p54
      %p56 = scmp.ne.s32.totalorder %s45, %s46
      %p57 = scmp.eq.s32.totalorder %s16, 0
      %p58 = por %p56, %p57
      %p59 = scmp.ne.s32.totalorder %s45, %s46
      %p60 = scmp.eq.s32.totalorder %s17, 1
      %p61 = por %p59, %p60
      %p63 = scmp.ne.s32.totalorder %s46, %s62
      %p64 = scmp.eq.s32.totalorder %s17, 0
      %p65 = por %p63, %p64
      %p66 = scmp.le.s32.totalorder 1, %s11
      %p67 = scmp.lt.s32.totalorder %s11, 3
      %p68 = pnand %p66, %p67
      %p69 = pneg %p68
      // Predicated region
      $region9: #{tpu_custom_call.1} parent=5 // pred_check
        _
      $region10: #{tpu_custom_call.1} parent=5 // pred_check_branch
        %71 = sbr.rel (%p68) target = $region12
      $region11: #{tpu_custom_call.1} parent=5 // pred_region
        %s72 = ssub.s32 %s11, 1
        // Predicated region
        $region13: #{tpu_custom_call.1} parent=11 // pred_check
          %p73 = pneg %p32
        $region14: #{tpu_custom_call.1} parent=11 // pred_check_branch
          %75 = sbr.rel (%p73) target = $region16
        $region15: #{tpu_custom_call.1} parent=11 // pred_region
          %s77 = ssub.s32 128, 128
          %78 = vsyncadd [#allocation3], %s77
          %s80 = sshll.u32 [#allocation2], 4
          %s81 = int_to_ptr.vmem [resolvable:$true] %s80
          %83 = dma.hbm_to_vmem [thread:$0]  %s0, 128, %s81, [#allocation3]
        $region16: #{tpu_custom_call.1} parent=11 // pred_fallthru
          _
      $region12: #{tpu_custom_call.1} parent=5 // pred_fallthru
        _
      %p84 = scmp.lt.s32.totalorder %s11, 2
      // Predicated region
      $region17: #{tpu_custom_call.1} parent=5 // pred_check
        %p85 = pneg %p84
      $region18: #{tpu_custom_call.1} parent=5 // pred_check_branch
        %87 = sbr.rel (%p85) target = $region20
      $region19: #{tpu_custom_call.1} parent=5 // pred_region
        _
      $region20: #{tpu_custom_call.1} parent=5 // pred_fallthru
        _
      %p88 = scmp.le.s32.totalorder 1, %s11
      %p89 = scmp.lt.s32.totalorder %s11, 3
      %p90 = pnand %p88, %p89
      %p91 = pneg %p90
      // Predicated region
      $region21: #{tpu_custom_call.1} parent=5 // pred_check
        _
      $region22: #{tpu_custom_call.1} parent=5 // pred_check_branch
        %93 = sbr.rel (%p90) target = $region24
      $region23: #{tpu_custom_call.1} parent=5 // pred_region
        %s94 = ssub.s32 %s11, 1
        // Predicated region
        $region25: #{tpu_custom_call.1} parent=23 // pred_check
          %p95 = pneg %p32
        $region26: #{tpu_custom_call.1} parent=23 // pred_check_branch
          %97 = sbr.rel (%p95) target = $region28
        $region27: #{tpu_custom_call.1} parent=23 // pred_region
          %98 = dma.done [#allocation3], 128
        $region28: #{tpu_custom_call.1} parent=23 // pred_fallthru
          _
        %p99 = pneg %p32
        %p100 = pneg %p29
        %p101 = pneg %p58
        %p102 = pneg %p55
        %s103 = sand.u32 %s45, 1
        %s104 = scalar_lea.sflag [#allocation4], %s103
        %s105 = sand.u32 %s45, 1
        %s106 = smul.addr %s105, 8
        %s107 = scalar_lea.vmem [#allocation5], %s106
        %v108 = vld [vmem:[#allocation2] sm:$0xff]
        %v109 = vmul.f32 %v108, 2.0
        %110 = vst [vmem:[%s107] sm:$0xff] %v109
        %s111 = sand.u32 %s45, 1
        %s112 = scalar_lea.sflag [#allocation4], %s111
        %s113 = sand.u32 %s45, 1
        %s114 = smul.addr %s113, 8
        %s115 = scalar_lea.vmem [#allocation5], %s114
        // Predicated region
        $region29: #{tpu_custom_call.1} parent=23 // pred_check
          %p116 = pneg %p55
        $region30: #{tpu_custom_call.1} parent=23 // pred_check_branch
          %118 = sbr.rel (%p116) target = $region32
        $region31: #{tpu_custom_call.1} parent=23 // pred_region
          %s120 = ssub.s32 128, 128
          %121 = vsyncadd %s112, %s120
          %s122 = smul.addr %s16, 128
          %s123 = scalar_lea.hbm %s1, %s122
          %s125 = sshll.u32 %s115, 4
          %s126 = int_to_ptr.vmem [resolvable:$true] %s125
          %128 = dma.vmem_to_hbm [thread:$0]  %s126, 128, %s123, %s112
        $region32: #{tpu_custom_call.1} parent=23 // pred_fallthru
          _
      $region24: #{tpu_custom_call.1} parent=5 // pred_fallthru
        _
      %p129 = scmp.le.s32.totalorder 2, %s11
      // Predicated region
      $region33: #{tpu_custom_call.1} parent=5 // pred_check
        %p130 = pneg %p129
      $region34: #{tpu_custom_call.1} parent=5 // pred_check_branch
        %132 = sbr.rel (%p130) target = $region36
      $region35: #{tpu_custom_call.1} parent=5 // pred_region
        %s133 = ssub.s32 %s11, 2
        // Predicated region
        $region37: #{tpu_custom_call.1} parent=35 // pred_check
          %p134 = pneg %p61
        $region38: #{tpu_custom_call.1} parent=35 // pred_check_branch
          %136 = sbr.rel (%p134) target = $region40
        $region39: #{tpu_custom_call.1} parent=35 // pred_region
          %s137 = sand.u32 %s46, 1
          %s138 = scalar_lea.sflag [#allocation4], %s137
          %s139 = sand.u32 %s46, 1
          %s140 = smul.addr %s139, 8
          %s141 = scalar_lea.vmem [#allocation5], %s140
          %142 = dma.done %s138, 128
        $region40: #{tpu_custom_call.1} parent=35 // pred_fallthru
          _
      $region36: #{tpu_custom_call.1} parent=5 // pred_fallthru
        _
    $region6: #{tpu_custom_call.1} parent=1 // loop_footer
      %s15 = sadd.s32 1, %s11
    $region7: #{tpu_custom_call.1} parent=1 // loop_footer_branch
      %10 = sbr.rel target = $region3
    $region8: #{tpu_custom_call.1} parent=1 // loop_exit
      _
    %143 = vsyncpa [#allocation3], 1
    %s144 = scalar_lea.sflag [#allocation3], 1
    %145 = vsyncpa %s144, 1
    %146 = vsyncpa [#allocation4], 1
    %s147 = scalar_lea.sflag [#allocation4], 1
    %148 = vsyncpa %s147, 1

// kernel: _feed_forward_impl.1
$region0: #{_feed_forward_impl.1}
  #allocation0 [shape = 'u32[]', space=smem, size = 0x4, offset = 0x4, fixed_abs, tag = 'smem constant byte address 0x4 - core index']
  #allocation1 [shape = 'u32[144,128]{1,0:T(1,128)}', space=vmem, size = 0x12000, scoped, tag = 'internal scratch']
  #allocation2 [shape = 'f32[16,128]{1,0:T(8,128)}', space=vmem, size = 0x2000, scoped, tag = 'scratch operand']
  %s0 = inlined_call_operand.vmem [shape: f32[16,128], index: 0, kind: input, shape index: {}]
  %s1 = inlined_call_operand.vmem [shape: f32[128,128], index: 1, kind: input, shape index: {}]
  %s2 = inlined_call_operand.vmem [shape: f32[1,128], index: 2, kind: input, shape index: {}]
  %s3 = inlined_call_operand.vmem [shape: f32[128,128], index: 3, kind: input, shape index: {}]
  %s4 = inlined_call_operand.vmem [shape: f32[1,128], index: 4, kind: input, shape index: {}]
  %s5 = inlined_call_operand.vmem [shape: f32[16,128], index: 5, kind: output, shape index: {}]
  %s6 = sld [smem:[#allocation0]]
  $region30: #{_feed_forward_impl.1} parent=0
    _
  %s8 = ssub.s32 1, %s6
  %s9 = scalar_select 0, %s8, %s6
  // Predicated region
  $region2: #{_feed_forward_impl.1} parent=0 // pred_check
    _
  $region3: #{_feed_forward_impl.1} parent=0 // pred_check_branch
    %11 = sbr.rel (0) target = $region5
  $region4: #{_feed_forward_impl.1} parent=0 // pred_region
    _
  $region5: #{_feed_forward_impl.1} parent=0 // pred_fallthru
    _
  // Predicated region
  $region6: #{_feed_forward_impl.1} parent=0 // pred_check
    _
  $region7: #{_feed_forward_impl.1} parent=0 // pred_check_branch
    %13 = sbr.rel (0) target = $region9
  $region8: #{_feed_forward_impl.1} parent=0 // pred_region
    _
  $region9: #{_feed_forward_impl.1} parent=0 // pred_fallthru
    _
  // Predicated region
  $region10: #{_feed_forward_impl.1} parent=0 // pred_check
    _
  $region11: #{_feed_forward_impl.1} parent=0 // pred_check_branch
    %15 = sbr.rel (0) target = $region13
  $region12: #{_feed_forward_impl.1} parent=0 // pred_region
    _
  $region13: #{_feed_forward_impl.1} parent=0 // pred_fallthru
    _
  // Predicated region
  $region14: #{_feed_forward_impl.1} parent=0 // pred_check
    _
  $region15: #{_feed_forward_impl.1} parent=0 // pred_check_branch
    %17 = sbr.rel (0) target = $region17
  $region16: #{_feed_forward_impl.1} parent=0 // pred_region
    _
  $region17: #{_feed_forward_impl.1} parent=0 // pred_fallthru
    _
  // Predicated region
  $region18: #{_feed_forward_impl.1} parent=0 // pred_check
    _
  $region19: #{_feed_forward_impl.1} parent=0 // pred_check_branch
    %19 = sbr.rel (0) target = $region21
  $region20: #{_feed_forward_impl.1} parent=0 // pred_region
    _
  $region21: #{_feed_forward_impl.1} parent=0 // pred_fallthru
    _
  %v20 = vld [vmem:[%s0] sm:$0xff]
  %v21 = vld [vmem:[%s0 + $0x8] sm:$0xff]
  %v22 = vld [vmem:[%s4] sm:$0x1]
  %v24 = vlaneseq
  %v25 = vshrl.u32 %v24, 7
  %v26 = vsub.s32 0, %v25
  %v27 = vrot.slane %v22, %v26
  %29 = vst [vmem:[#allocation2] sm:$0xff] %v27
  %30 = vst [vmem:[#allocation2 + $0x8] sm:$0xff] %v27
  %v31 = vld [vmem:[%s1] sm:$0xff]
  %v32 = vld [vmem:[%s1 + $0x8] sm:$0xff]
  %v33 = vld [vmem:[%s1 + $0x10] sm:$0xff]
  %v34 = vld [vmem:[%s1 + $0x18] sm:$0xff]
  %v35 = vld [vmem:[%s1 + $0x20] sm:$0xff]
  %v36 = vld [vmem:[%s1 + $0x28] sm:$0xff]
  %v37 = vld [vmem:[%s1 + $0x30] sm:$0xff]
  %v38 = vld [vmem:[%s1 + $0x38] sm:$0xff]
  %v39 = vld [vmem:[%s1 + $0x40] sm:$0xff]
  %v40 = vld [vmem:[%s1 + $0x48] sm:$0xff]
  %v41 = vld [vmem:[%s1 + $0x50] sm:$0xff]
  %v42 = vld [vmem:[%s1 + $0x58] sm:$0xff]
  %v43 = vld [vmem:[%s1 + $0x60] sm:$0xff]
  %v44 = vld [vmem:[%s1 + $0x68] sm:$0xff]
  %v45 = vld [vmem:[%s1 + $0x70] sm:$0xff]
  %v46 = vld [vmem:[%s1 + $0x78] sm:$0xff]
  %v47 = vld [vmem:[%s2] sm:$0x1]
  %v49 = vlaneseq
  %v50 = vshrl.u32 %v49, 7
  %v51 = vsub.s32 0, %v50
  %v52 = vrot.slane %v47, %v51
  %54 = vmatprep.subr.mxu0 0.0
  %55 = vmatpush1.msra.mxu0 %v31
  %56 = vmatprep.subr.mxu0 0.0
  %57 = vmatpush1.msra.mxu0 %v32
  %58 = vmatprep.subr.mxu0 0.0
  %59 = vmatpush1.msra.mxu0 %v33
  %60 = vmatprep.subr.mxu0 0.0
  %61 = vmatpush1.msra.mxu0 %v34
  %62 = vmatprep.subr.mxu0 0.0
  %63 = vmatpush1.msra.mxu0 %v35
  %64 = vmatprep.subr.mxu0 0.0
  %65 = vmatpush1.msra.mxu0 %v36
  %66 = vmatprep.subr.mxu0 0.0
  %67 = vmatpush1.msra.mxu0 %v37
  %68 = vmatprep.subr.mxu0 0.0
  %69 = vmatpush1.msra.mxu0 %v38
  %70 = vmatprep.subr.mxu0 0.0
  %71 = vmatpush1.msra.mxu0 %v39
  %72 = vmatprep.subr.mxu0 0.0
  %73 = vmatpush1.msra.mxu0 %v40
  %74 = vmatprep.subr.mxu0 0.0
  %75 = vmatpush1.msra.mxu0 %v41
  %76 = vmatprep.subr.mxu0 0.0
  %77 = vmatpush1.msra.mxu0 %v42
  %78 = vmatprep.subr.mxu0 0.0
  %79 = vmatpush1.msra.mxu0 %v43
  %80 = vmatprep.subr.mxu0 0.0
  %81 = vmatpush1.msra.mxu0 %v44
  %82 = vmatprep.subr.mxu0 0.0
  %83 = vmatpush1.msra.mxu0 %v45
  %84 = vmatprep.subr.mxu0 0.0
  %85 = vmatpush1.msra.mxu0 %v46
  %86 = vmatprep.subr.mxu0 0.0
  %87 = vmatpush1.msra.mxu0 0.0
  %88 = vmatprep.subr.mxu0 0.0
  %89 = vmatpush1.msra.mxu0 0.0
  %90 = vmatprep.subr.mxu0 0.0
  %91 = vmatpush1.msra.mxu0 0.0
  %92 = vmatprep.subr.mxu0 0.0
  %93 = vmatpush1.msra.mxu0 0.0
  %94 = vmatprep.subr.mxu0 0.0
  %95 = vmatpush1.msra.mxu0 0.0
  %96 = vmatprep.subr.mxu0 0.0
  %97 = vmatpush1.msra.mxu0 0.0
  %98 = vmatprep.subr.mxu0 0.0
  %99 = vmatpush1.msra.mxu0 0.0
  %100 = vmatprep.subr.mxu0 0.0
  %101 = vmatpush1.msra.mxu0 0.0
  %102 = vmatprep.subr.mxu0 0.0
  %103 = vmatpush1.msra.mxu0 0.0
  %104 = vmatprep.subr.mxu0 0.0
  %105 = vmatpush1.msra.mxu0 0.0
  %106 = vmatprep.subr.mxu0 0.0
  %107 = vmatpush1.msra.mxu0 0.0
  %108 = vmatprep.subr.mxu0 0.0
  %109 = vmatpush1.msra.mxu0 0.0
  %110 = vmatprep.subr.mxu0 0.0
  %111 = vmatpush1.msra.mxu0 0.0
  %112 = vmatprep.subr.mxu0 0.0
  %113 = vmatpush1.msra.mxu0 0.0
  %114 = vmatprep.subr.mxu0 0.0
  %115 = vmatpush1.msra.mxu0 0.0
  %116 = vmatprep.subr.mxu0 0.0
  %117 = vmatpush1.msra.mxu0 0.0
  %118 = vmatprep.mubr.f32.mxu0 0.0
  %119 = vmatmul.mubr.f32.gmra.mrb[0].mxu0 %v20
  %v120 = vpop.f32.mrb[0].mxu0
  %v121 = vadd.f32 %v52, %v120
  %v122 = vpop.f32.mrb[0].mxu0
  %123 = vmatprep.mubr.f32.mxu0 0.0
  %124 = vmatmul.mubr.f32.gmra.mrb[0].mxu0 %v21
  %v125 = vpop.f32.mrb[0].mxu0
  %v126 = vadd.f32 %v52, %v125
  %v127 = vpop.f32.mrb[0].mxu0
  %128 = vdwg.mxu0
  %v129 = vmul.f32 %v121, 0.5
  %v130 = vmul.f32 %v126, 0.5
  %v131 = vmul.f32 %v121, 0.70710677
  %v132 = vmul.f32 %v126, 0.70710677
  %v133 = verf.f32.pop %v131
  %v134 = verf.f32.pop %v132
  %v135 = vadd.f32 %v133, 1.0
  %v136 = vadd.f32 %v134, 1.0
  %v137 = vmul.f32 %v129, %v135
  %v138 = vmul.f32 %v130, %v136
  %v139 = vld [vmem:[#allocation2] sm:$0xff]
  %v140 = vld [vmem:[#allocation2 + $0x8] sm:$0xff]
  %v141 = vld [vmem:[%s3] sm:$0xff]
  %v142 = vld [vmem:[%s3 + $0x8] sm:$0xff]
  %v143 = vld [vmem:[%s3 + $0x10] sm:$0xff]
  %v144 = vld [vmem:[%s3 + $0x18] sm:$0xff]
  %v145 = vld [vmem:[%s3 + $0x20] sm:$0xff]
  %v146 = vld [vmem:[%s3 + $0x28] sm:$0xff]
  %v147 = vld [vmem:[%s3 + $0x30] sm:$0xff]
  %v148 = vld [vmem:[%s3 + $0x38] sm:$0xff]
  %v149 = vld [vmem:[%s3 + $0x40] sm:$0xff]
  %v150 = vld [vmem:[%s3 + $0x48] sm:$0xff]
  %v151 = vld [vmem:[%s3 + $0x50] sm:$0xff]
  %v152 = vld [vmem:[%s3 + $0x58] sm:$0xff]
  %v153 = vld [vmem:[%s3 + $0x60] sm:$0xff]
  %v154 = vld [vmem:[%s3 + $0x68] sm:$0xff]
  %v155 = vld [vmem:[%s3 + $0x70] sm:$0xff]
  %v156 = vld [vmem:[%s3 + $0x78] sm:$0xff]
  %157 = vmatprep.subr.mxu0 0.0
  %158 = vmatpush1.msra.mxu0 %v141
  %159 = vmatprep.subr.mxu0 0.0
  %160 = vmatpush1.msra.mxu0 %v142
  %161 = vmatprep.subr.mxu0 0.0
  %162 = vmatpush1.msra.mxu0 %v143
  %163 = vmatprep.subr.mxu0 0.0
  %164 = vmatpush1.msra.mxu0 %v144
  %165 = vmatprep.subr.mxu0 0.0
  %166 = vmatpush1.msra.mxu0 %v145
  %167 = vmatprep.subr.mxu0 0.0
  %168 = vmatpush1.msra.mxu0 %v146
  %169 = vmatprep.subr.mxu0 0.0
  %170 = vmatpush1.msra.mxu0 %v147
  %171 = vmatprep.subr.mxu0 0.0
  %172 = vmatpush1.msra.mxu0 %v148
  %173 = vmatprep.subr.mxu0 0.0
  %174 = vmatpush1.msra.mxu0 %v149
  %175 = vmatprep.subr.mxu0 0.0
  %176 = vmatpush1.msra.mxu0 %v150
  %177 = vmatprep.subr.mxu0 0.0
  %178 = vmatpush1.msra.mxu0 %v151
  %179 = vmatprep.subr.mxu0 0.0
  %180 = vmatpush1.msra.mxu0 %v152
  %181 = vmatprep.subr.mxu0 0.0
  %182 = vmatpush1.msra.mxu0 %v153
  %183 = vmatprep.subr.mxu0 0.0
  %184 = vmatpush1.msra.mxu0 %v154
  %185 = vmatprep.subr.mxu0 0.0
  %186 = vmatpush1.msra.mxu0 %v155
  %187 = vmatprep.subr.mxu0 0.0
  %188 = vmatpush1.msra.mxu0 %v156
  %189 = vmatprep.subr.mxu0 0.0
  %190 = vmatpush1.msra.mxu0 0.0
  %191 = vmatprep.subr.mxu0 0.0
  %192 = vmatpush1.msra.mxu0 0.0
  %193 = vmatprep.subr.mxu0 0.0
  %194 = vmatpush1.msra.mxu0 0.0
  %195 = vmatprep.subr.mxu0 0.0
  %196 = vmatpush1.msra.mxu0 0.0
  %197 = vmatprep.subr.mxu0 0.0
  %198 = vmatpush1.msra.mxu0 0.0
  %199 = vmatprep.subr.mxu0 0.0
  %200 = vmatpush1.msra.mxu0 0.0
  %201 = vmatprep.subr.mxu0 0.0
  %202 = vmatpush1.msra.mxu0 0.0
  %203 = vmatprep.subr.mxu0 0.0
  %204 = vmatpush1.msra.mxu0 0.0
  %205 = vmatprep.subr.mxu0 0.0
  %206 = vmatpush1.msra.mxu0 0.0
  %207 = vmatprep.subr.mxu0 0.0
  %208 = vmatpush1.msra.mxu0 0.0
  %209 = vmatprep.subr.mxu0 0.0
  %210 = vmatpush1.msra.mxu0 0.0
  %211 = vmatprep.subr.mxu0 0.0
  %212 = vmatpush1.msra.mxu0 0.0
  %213 = vmatprep.subr.mxu0 0.0
  %214 = vmatpush1.msra.mxu0 0.0
  %215 = vmatprep.subr.mxu0 0.0
  %216 = vmatpush1.msra.mxu0 0.0
  %217 = vmatprep.subr.mxu0 0.0
  %218 = vmatpush1.msra.mxu0 0.0
  %219 = vmatprep.subr.mxu0 0.0
  %220 = vmatpush1.msra.mxu0 0.0
  %221 = vmatprep.mubr.f32.mxu0 0.0
  %222 = vmatmul.mubr.f32.gmra.mrb[0].mxu0 %v137
  %v223 = vpop.f32.mrb[0].mxu0
  %v224 = vadd.f32 0.0, %v223
  %v225 = vpop.f32.mrb[0].mxu0
  %226 = vmatprep.mubr.f32.mxu0 0.0
  %227 = vmatmul.mubr.f32.gmra.mrb[0].mxu0 %v138
  %v228 = vpop.f32.mrb[0].mxu0
  %v229 = vadd.f32 0.0, %v228
  %v230 = vpop.f32.mrb[0].mxu0
  %231 = vdwg.mxu0
  %v232 = vadd.f32 %v139, %v224
  %v233 = vadd.f32 %v140, %v229
  %234 = vst [vmem:[#allocation2] sm:$0xff] %v232
  %235 = vst [vmem:[#allocation2 + $0x8] sm:$0xff] %v233
  %v236 = vld [vmem:[#allocation2] sm:$0xff]
  %v237 = vld [vmem:[#allocation2 + $0x8] sm:$0xff]
  %238 = vst [vmem:[%s5] sm:$0xff] %v236
  %239 = vst [vmem:[%s5 + $0x8] sm:$0xff] %v237
  // Predicated region
  $region22: #{_feed_forward_impl.1} parent=0 // pred_check
    _
  $region23: #{_feed_forward_impl.1} parent=0 // pred_check_branch
    %241 = sbr.rel (0) target = $region25
  $region24: #{_feed_forward_impl.1} parent=0 // pred_region
    _
  $region25: #{_feed_forward_impl.1} parent=0 // pred_fallthru
    _
  // Predicated region
  $region26: #{_feed_forward_impl.1} parent=0 // pred_check
    _
  $region27: #{_feed_forward_impl.1} parent=0 // pred_check_branch
    %243 = sbr.rel (0) target = $region29
  $region28: #{_feed_forward_impl.1} parent=0 // pred_region
    _
  $region29: #{_feed_forward_impl.1} parent=0 // pred_fallthru
    _

</llo_original>
